<compile_context>
chip_gen: v7x
topology: tpu7x:2x2x1
jax: 0.10.0
libtpu: 0.0.40
codegen_flags: <defaults>
</compile_context>

<pallas_src>
import functools
import math

import numpy as np
import jax
import jax.numpy as jnp
from jax.experimental import pallas as pl
from jax.experimental.pallas import tpu as pltpu


# ----------------------------- parameters ---------------------------------

def fixed_embedding_table(vocab, d_model):
    """Reproduces FixedEmbedding's sinusoidal table (torch, float32)."""
    w = np.zeros((vocab, d_model), dtype=np.float32)
    position = np.arange(vocab, dtype=np.float32)[:, None]
    div_term = np.exp(np.arange(0, d_model, 2, dtype=np.float32)
                      * -(math.log(10000.0) / d_model))
    w[:, 0::2] = np.sin(position * div_term)
    w[:, 1::2] = np.cos(position * div_term)
    return w


def init_token_embedding_weight(key, c_in, d_model, kernel=3):
    """kaiming_normal_(mode='fan_in', nonlinearity='leaky_relu'), torch layout
    [d_model, c_in, kernel]."""
    fan_in = c_in * kernel
    gain = math.sqrt(2.0 / (1.0 + 0.01 ** 2))
    std = gain / math.sqrt(fan_in)
    return (jax.random.normal(key, (d_model, c_in, kernel), dtype=jnp.float32)
            * std)


# Temporal embedding vocab layout (embed_type='fixed', freq='h'):
# x_mark[..., 0]=month(13), 1=day(32), 2=weekday(7), 3=hour(24)
_VOCABS = (13, 32, 7, 24)
_OFFSETS = (0, 13, 45, 52)          # compile-time constants folded into kernel
_V_PAD = 128                        # concatenated table padded to 128 rows (lane/K friendly)


def build_temporal_table(d_model):
    tables = [fixed_embedding_table(v, d_model) for v in _VOCABS]
    table = np.concatenate(tables, axis=0)                       # [76, d_model]
    pad = np.zeros((_V_PAD - table.shape[0], d_model), np.float32)
    return jnp.asarray(np.concatenate([table, pad], axis=0))     # [128, d_model]


def prepare_params(conv_weight, d_model, compute_dtype=jnp.float32):
    """Hoisted once-per-model preprocessing (NOT per forward call).

    conv_weight: torch Conv1d layout [d_model, c_in, 3].
    Returns (w_folded [3*c_in, d_model], temporal_table [_V_PAD, d_model]).
    On v6e/v7x, compute_dtype=jnp.bfloat16 halves resident VMEM and feeds the
    MXU's native path (accumulation stays f32); default f32 keeps tight numerics.
    """
    d_model_w, c_in, k = conv_weight.shape
    assert k == 3 and d_model_w == d_model
    # row (k*c_in + c) of w_folded = conv_weight[:, c, k]
    w_folded = jnp.transpose(conv_weight, (2, 1, 0)).reshape(3 * c_in, d_model)
    table = build_temporal_table(d_model)
    return w_folded.astype(compute_dtype), table.astype(compute_dtype)


# ------------------------------- kernel ------------------------------------

def data_embedding_kernel(x_ref, xm_ref, w_ref, table_ref, out_ref, *, has_mark):
    Bt, L, C = x_ref.shape
    d_model = out_ref.shape[-1]

    x = x_ref[...].astype(w_ref.dtype)                      # [Bt, L, C]

    # circular +-1 shifts along the sequence axis (wrap within each batch row);
    # replaces the wrapper-side HBM x_pad concatenate.
    x_prev = jnp.concatenate([x[:, L - 1:L, :], x[:, :L - 1, :]], axis=1)
    x_next = jnp.concatenate([x[:, 1:, :], x[:, :1, :]], axis=1)

    # im2col: ONE [Bt*L, 3C] @ [3C, d_model] MXU matmul (f32 accumulation).
    xcat = jnp.concatenate([x_prev, x, x_next], axis=-1).reshape(Bt * L, 3 * C)
    acc = jnp.dot(xcat, w_ref[...], preferred_element_type=jnp.float32)

    if has_mark:
        # temporal embedding: sum of 4 fixed-table lookups == multi-hot @ table.
        V = table_ref.shape[0]
        n_feat = xm_ref.shape[-1]
        xm = xm_ref[...].reshape(Bt * L, n_feat)            # raw indices, int32
        iota = jax.lax.broadcasted_iota(jnp.int32, (Bt * L, V), 1)
        hit = jnp.zeros((Bt * L, V), jnp.bool_)
        for c in range(n_feat):                             # offsets are static
            hit = jnp.logical_or(hit, iota == (xm[:, c:c + 1] + _OFFSETS[c]))
        mh = hit.astype(table_ref.dtype)                    # single cast
        acc = acc + jnp.dot(mh, table_ref[...],
                            preferred_element_type=jnp.float32)

    out_ref[...] = acc.reshape(Bt, L, d_model).astype(out_ref.dtype)


# ------------------------------- wrapper ------------------------------------

def _pad_to(n, m):
    return ((n + m - 1) // m) * m


def _choose_batch_tile(B, L, c_in, d_model):
    """Largest divisor-of-B batch tile whose padded-lane VMEM footprint fits a
    conservative budget (valid on v5e/v6e/v7x), keeping >=2 grid steps when
    B >= 2 so v7x's second TensorCore is not idle."""
    rows = _pad_to(L, 8)
    # double-buffered pipelined I/O blocks (lane dims pad to 128 in VMEM)
    io_per_b = 2 * rows * (_pad_to(c_in, 128) + _pad_to(len(_VOCABS), 128)
                           + _pad_to(d_model, 128)) * 4
    # single-buffered f32 compute intermediates (im2col, multi-hot, accumulator)
    tmp_per_b = rows * (_pad_to(3 * c_in, 128) + _V_PAD
                        + _pad_to(d_model, 128)) * 4
    per_b = io_per_b + tmp_per_b
    budget = 24 * 1024 * 1024
    cap = max(1, budget // per_b)
    if B >= 2:
        cap = min(cap, B // 2)
    bt = 1
    for d in range(1, B + 1):
        if B % d == 0 and d <= cap:
            bt = d
    return bt


def data_embedding_wo_pos(x, x_mark, w_folded, temporal_table,
                          *, out_dtype=jnp.float32):
    """x: [B, L, c_in] float32; x_mark: [B, L, 4] int (month,day,weekday,hour)
    or None; w_folded/temporal_table from prepare_params().
    Returns [B, L, d_model]."""
    B, L, c_in = x.shape
    d_model = w_folded.shape[-1]
    V = temporal_table.shape[0]
    n_feat = len(_VOCABS)

    has_mark = x_mark is not None
    if has_mark:
        xm = x_mark.astype(jnp.int32)
    else:
        xm = jnp.zeros((B, L, n_feat), jnp.int32)   # never read inside kernel

    Bt = _choose_batch_tile(B, L, c_in, d_model)
    grid = (B // Bt,)

    kernel = functools.partial(data_embedding_kernel, has_mark=has_mark)

    return pl.pallas_call(
        kernel,
        out_shape=jax.ShapeDtypeStruct((B, L, d_model), out_dtype),
        grid=grid,
        in_specs=[
            pl.BlockSpec((Bt, L, c_in), lambda b: (b, 0, 0)),
            pl.BlockSpec((Bt, L, n_feat), lambda b: (b, 0, 0)),
            # grid-invariant constants (weight / temporal table). Kept with the
            # default buffering for portability.
            # TODO(synk): use pipeline_mode=pl.Buffered(1) where supported to
            #             drop their second VMEM buffer (v7x VMEM headroom).
            pl.BlockSpec((3 * c_in, d_model), lambda b: (0, 0)),
            pl.BlockSpec((V, d_model), lambda b: (0, 0)),
        ],
        out_specs=pl.BlockSpec((Bt, L, d_model), lambda b: (b, 0, 0)),
        compiler_params=pltpu.CompilerParams(
            dimension_semantics=("parallel",),
            vmem_limit_bytes=48 * 1024 * 1024),
    )(x, xm, w_folded, temporal_table)


# ------------------------------ reference -----------------------------------

def reference(x, x_mark, conv_weight, temporal_table):
    B, L, c_in = x.shape
    d_model = conv_weight.shape[0]
    xp = jnp.concatenate([x[:, -1:, :], x, x[:, :1, :]], axis=1)
    conv = jnp.zeros((B, L, d_model), jnp.float32)
    for k in range(3):
        conv = conv + jnp.einsum("blc,dc->bld", xp[:, k:k + L, :],
                                 conv_weight[:, :, k])
    if x_mark is None:
        return conv
    xm_off = x_mark.astype(jnp.int32) + jnp.asarray(_OFFSETS, jnp.int32)[None, None, :]
    temporal = jnp.take(temporal_table, xm_off, axis=0).sum(axis=2)
    return conv + temporal


# --------------------------------- main --------------------------------------

if __name__ == "__main__":
    # d_model chosen as a multiple of 128 so output stores are lane-dense
    # (unmasked vst); real configs (d_model=512/768) are likewise lane-dense.
    B, L, c_in, d_model = 2, 16, 4, 128

    key = jax.random.PRNGKey(0)
    kx, kw, km = jax.random.split(key, 3)

    x = jax.random.normal(kx, (B, L, c_in), dtype=jnp.float32)

    # x_mark: month [0,13), day [0,32), weekday [0,7), hour [0,24)
    maxvals = jnp.asarray(_VOCABS, dtype=jnp.int32)
    u = jax.random.uniform(km, (B, L, 4))
    x_mark = jnp.floor(u * maxvals[None, None, :]).astype(jnp.int32)

    conv_weight = init_token_embedding_weight(kw, c_in, d_model)
    w_folded, temporal_table = prepare_params(conv_weight, d_model)

    out = data_embedding_wo_pos(x, x_mark, w_folded, temporal_table)
    out = jax.block_until_ready(out)

    ref = reference(x, x_mark, conv_weight, temporal_table)
    np.testing.assert_allclose(np.asarray(out), np.asarray(ref),
                               rtol=1e-4, atol=1e-4)

    # also exercise the x_mark=None branch (temporal path skipped at trace time)
    out_none = jax.block_until_ready(
        data_embedding_wo_pos(x, None, w_folded, temporal_table))
    ref_none = reference(x, None, conv_weight, temporal_table)
    np.testing.assert_allclose(np.asarray(out_none), np.asarray(ref_none),
                               rtol=1e-4, atol=1e-4)

    print("KERNEL_OK")
</pallas_src>

<mosaic_0001>
module attributes {stable_mosaic.version = 11 : i64} {
  func.func @data_embedding_kernel(%arg0: i32, %arg1: memref<1x16x4xf32, #tpu.memory_space<vmem>>, %arg2: memref<1x16x4xi32, #tpu.memory_space<vmem>>, %arg3: memref<12x128xf32, #tpu.memory_space<vmem>>, %arg4: memref<128x128xf32, #tpu.memory_space<vmem>>, %arg5: memref<1x16x128xf32, #tpu.memory_space<vmem>>) attributes {dimension_semantics = [#tpu.dimension_semantics<parallel>], iteration_bounds = array<i64: 2>, scalar_prefetch = 0 : i64, scratch_operands = 0 : i64, tpu.core_type = #tpu.core_type<tc>, window_params = [{transform_indices = @transform_0, window_bounds = array<i64: 1, 16, 4>}, {transform_indices = @transform_1, window_bounds = array<i64: 1, 16, 4>}, {pipeline_mode = #tpu.pipeline_mode<synchronous>, transform_indices = @transform_2, window_bounds = array<i64: 12, 128>}, {pipeline_mode = #tpu.pipeline_mode<synchronous>, transform_indices = @transform_3, window_bounds = array<i64: 128, 128>}, {transform_indices = @transform_4, window_bounds = array<i64: 1, 16, 128>}]} {
    %c0 = arith.constant 0 : index
    %c0_0 = arith.constant 0 : index
    %c0_1 = arith.constant 0 : index
    %0 = vector.load %arg1[%c0, %c0_0, %c0_1] : memref<1x16x4xf32, #tpu.memory_space<vmem>>, vector<1x16x4xf32>
    %1 = vector.extract_strided_slice %0 {offsets = [0, 15, 0], sizes = [1, 1, 4], strides = [1, 1, 1]} : vector<1x16x4xf32> to vector<1x1x4xf32>
    %2 = vector.extract_strided_slice %0 {offsets = [0, 0, 0], sizes = [1, 15, 4], strides = [1, 1, 1]} : vector<1x16x4xf32> to vector<1x15x4xf32>
    %3 = tpu.concatenate %1, %2 in 1 : vector<1x1x4xf32>, vector<1x15x4xf32> -> vector<1x16x4xf32>
    %4 = vector.extract_strided_slice %0 {offsets = [0, 1, 0], sizes = [1, 15, 4], strides = [1, 1, 1]} : vector<1x16x4xf32> to vector<1x15x4xf32>
    %5 = vector.extract_strided_slice %0 {offsets = [0, 0, 0], sizes = [1, 1, 4], strides = [1, 1, 1]} : vector<1x16x4xf32> to vector<1x1x4xf32>
    %6 = tpu.concatenate %4, %5 in 1 : vector<1x15x4xf32>, vector<1x1x4xf32> -> vector<1x16x4xf32>
    %7 = tpu.concatenate %3, %0, %6 in 2 : vector<1x16x4xf32>, vector<1x16x4xf32>, vector<1x16x4xf32> -> vector<1x16x12xf32>
    %8 = vector.shape_cast %7 : vector<1x16x12xf32> to vector<16x12xf32>
    %c0_2 = arith.constant 0 : index
    %c0_3 = arith.constant 0 : index
    %9 = vector.load %arg3[%c0_2, %c0_3] : memref<12x128xf32, #tpu.memory_space<vmem>>, vector<12x128xf32>
    %cst = arith.constant dense<0.000000e+00> : vector<16x128xf32>
    %10 = tpu.matmul %8, %9, %cst {dimension_numbers = #tpu.dot_dimension_numbers<[1], [0], [0], [1], [0, 0, 1, 1], [], []>} : vector<16x12xf32>, vector<12x128xf32>, vector<16x128xf32> -> vector<16x128xf32>
    %c0_4 = arith.constant 0 : index
    %c0_5 = arith.constant 0 : index
    %c0_6 = arith.constant 0 : index
    %11 = vector.load %arg2[%c0_4, %c0_5, %c0_6] : memref<1x16x4xi32, #tpu.memory_space<vmem>>, vector<1x16x4xi32>
    %12 = vector.shape_cast %11 : vector<1x16x4xi32> to vector<16x4xi32>
    %13 = tpu.iota {dimensions = array<i32: 1>} : vector<16x128xi32>
    %false = arith.constant false
    %14 = vector.broadcast %false : i1 to vector<16x128xi1>
    %15 = vector.extract_strided_slice %12 {offsets = [0, 0], sizes = [16, 1], strides = [1, 1]} : vector<16x4xi32> to vector<16x1xi32>
    %c0_i32 = arith.constant 0 : i32
    %16 = vector.broadcast %c0_i32 : i32 to vector<16x1xi32>
    %17 = arith.addi %15, %16 : vector<16x1xi32>
    %18 = vector.broadcast %17 : vector<16x1xi32> to vector<16x128xi32>
    %19 = arith.cmpi eq, %13, %18 : vector<16x128xi32>
    %20 = arith.ori %14, %19 : vector<16x128xi1>
    %21 = vector.extract_strided_slice %12 {offsets = [0, 1], sizes = [16, 1], strides = [1, 1]} : vector<16x4xi32> to vector<16x1xi32>
    %c13_i32 = arith.constant 13 : i32
    %22 = vector.broadcast %c13_i32 : i32 to vector<16x1xi32>
    %23 = arith.addi %21, %22 : vector<16x1xi32>
    %24 = vector.broadcast %23 : vector<16x1xi32> to vector<16x128xi32>
    %25 = arith.cmpi eq, %13, %24 : vector<16x128xi32>
    %26 = arith.ori %20, %25 : vector<16x128xi1>
    %27 = vector.extract_strided_slice %12 {offsets = [0, 2], sizes = [16, 1], strides = [1, 1]} : vector<16x4xi32> to vector<16x1xi32>
    %c45_i32 = arith.constant 45 : i32
    %28 = vector.broadcast %c45_i32 : i32 to vector<16x1xi32>
    %29 = arith.addi %27, %28 : vector<16x1xi32>
    %30 = vector.broadcast %29 : vector<16x1xi32> to vector<16x128xi32>
    %31 = arith.cmpi eq, %13, %30 : vector<16x128xi32>
    %32 = arith.ori %26, %31 : vector<16x128xi1>
    %33 = vector.extract_strided_slice %12 {offsets = [0, 3], sizes = [16, 1], strides = [1, 1]} : vector<16x4xi32> to vector<16x1xi32>
    %c52_i32 = arith.constant 52 : i32
    %34 = vector.broadcast %c52_i32 : i32 to vector<16x1xi32>
    %35 = arith.addi %33, %34 : vector<16x1xi32>
    %36 = vector.broadcast %35 : vector<16x1xi32> to vector<16x128xi32>
    %37 = arith.cmpi eq, %13, %36 : vector<16x128xi32>
    %38 = arith.ori %32, %37 : vector<16x128xi1>
    %39 = arith.extui %38 : vector<16x128xi1> to vector<16x128xi32>
    %40 = arith.sitofp %39 : vector<16x128xi32> to vector<16x128xf32>
    %c0_7 = arith.constant 0 : index
    %c0_8 = arith.constant 0 : index
    %41 = vector.load %arg4[%c0_7, %c0_8] : memref<128x128xf32, #tpu.memory_space<vmem>>, vector<128x128xf32>
    %cst_9 = arith.constant dense<0.000000e+00> : vector<16x128xf32>
    %42 = tpu.matmul %40, %41, %cst_9 {dimension_numbers = #tpu.dot_dimension_numbers<[1], [0], [0], [1], [0, 0, 1, 1], [], []>} : vector<16x128xf32>, vector<128x128xf32>, vector<16x128xf32> -> vector<16x128xf32>
    %43 = arith.addf %10, %42 : vector<16x128xf32>
    %44 = vector.shape_cast %43 : vector<16x128xf32> to vector<1x16x128xf32>
    %c0_10 = arith.constant 0 : index
    %c0_11 = arith.constant 0 : index
    %c0_12 = arith.constant 0 : index
    %45 = vector.load %arg5[%c0_10, %c0_11, %c0_12] : memref<1x16x128xf32, #tpu.memory_space<vmem>>, vector<1x16x128xf32>
    tpu.vector_store %arg5[%c0_10, %c0_11, %c0_12], %44 {strides = array<i32>} : memref<1x16x128xf32, #tpu.memory_space<vmem>>, vector<1x16x128xf32>,
    return
  }
  func.func @transform_0(%arg0: i32) -> (i32, i32, i32) {
    %c0_i32 = arith.constant 0 : i32
    %c0_i32_0 = arith.constant 0 : i32
    %c0_i32_1 = arith.constant 0 : i32
    return %arg0, %c0_i32, %c0_i32_0 : i32, i32, i32
  }
  func.func @transform_1(%arg0: i32) -> (i32, i32, i32) {
    %c0_i32 = arith.constant 0 : i32
    %c0_i32_0 = arith.constant 0 : i32
    %c0_i32_1 = arith.constant 0 : i32
    return %arg0, %c0_i32, %c0_i32_0 : i32, i32, i32
  }
  func.func @transform_2(%arg0: i32) -> (i32, i32) {
    %c0_i32 = arith.constant 0 : i32
    %c0_i32_0 = arith.constant 0 : i32
    %c0_i32_1 = arith.constant 0 : i32
    return %c0_i32, %c0_i32_0 : i32, i32
  }
  func.func @transform_3(%arg0: i32) -> (i32, i32) {
    %c0_i32 = arith.constant 0 : i32
    %c0_i32_0 = arith.constant 0 : i32
    %c0_i32_1 = arith.constant 0 : i32
    return %c0_i32, %c0_i32_0 : i32, i32
  }
  func.func @transform_4(%arg0: i32) -> (i32, i32, i32) {
    %c0_i32 = arith.constant 0 : i32
    %c0_i32_0 = arith.constant 0 : i32
    %c0_i32_1 = arith.constant 0 : i32
    return %arg0, %c0_i32, %c0_i32_0 : i32, i32, i32
  }
}

</mosaic_0001>

<llo_original>
// kernel: tpu_custom_call.1
$region0: #{tpu_custom_call.1}
  #allocation0 [shape = 'u32[]', space=smem, size = 0x4, offset = 0x4, fixed_abs, tag = 'smem constant byte address 0x4 - core index']
  #allocation1 [shape = 'u32[144,128]{1,0:T(1,128)}', space=vmem, size = 0x12000, scoped, tag = 'internal scratch']
  %s0 = inlined_call_operand.vmem [shape: f32[2,16,4], index: 0, kind: input, shape index: {}]
  %s1 = inlined_call_operand.vmem [shape: s32[2,16,4], index: 1, kind: input, shape index: {}]
  %s2 = inlined_call_operand.vmem [shape: f32[12,128], index: 2, kind: input, shape index: {}]
  %s3 = inlined_call_operand.hbm [shape: f32[128,128], index: 3, kind: input, shape index: {}]
  %s4 = inlined_call_operand.hbm [shape: f32[2,16,128], index: 4, kind: output, shape index: {}]
  %s5 = sld [smem:[#allocation0]]
  $region53: #{tpu_custom_call.1} parent=0
    _
  %s7 = ssub.s32 1, %s5
  %s8 = scalar_select 0, %s7, %s5
  $region1: #{tpu_custom_call.1} parent=0
    #allocation2 [shape = 'u8[65536]{0}', space=vmem, size = 0x10000, scoped, tag = 'input window, operand 3, single buffered']
    #allocation3 [shape = 's32[2]{0}', space=sflag, size = 0x8, scoped, tag = 'scoped memory for tpu_custom_call.1']
    #allocation4 [shape = 's32[2]{0}', space=sflag, size = 0x8, scoped, tag = 'scoped memory for tpu_custom_call.1']
    #allocation5 [shape = 'u8[16384]{0}', space=vmem, size = 0x4000, scoped, tag = 'output window, operand 0']
    %9 = vsyncpa [#allocation3], 0
    %10 = vsyncpa [#allocation4], 0
    %s11 = scalar_lea.sflag [#allocation4], 1
    %12 = vsyncpa %s11, 0
    loop: start=0, step=1, limit=4
    $region2: #{tpu_custom_call.1} parent=1 // loop_pre_header
      _
    $region3: #{tpu_custom_call.1} parent=1 // loop_header
      %s14 = sphi 0, %s18
      %p15 = scmp.ge.s32.totalorder %s14, 4
      %s24 = sphi 0, %s26
      %s27 = sphi 0, %s24
      %s28 = sphi 0, %s27
      %s44 = sphi 0, %s28
      %s50 = sphi 0, %s52
      %s53 = sphi 0, %s50
      %s54 = sphi 0, %s53
      %s70 = sphi 0, %s54
      %s74 = sphi 0, %s74
      %s76 = sphi 0, %s74
      %s77 = sphi 0, %s76
      %s91 = sphi 0, %s77
      %s95 = sphi 0, %s95
      %s97 = sphi 0, %s95
      %s98 = sphi 0, %s97
      %s112 = sphi 0, %s98
      %s118 = sphi 0, %s120
      %s121 = sphi 0, %s118
      %s122 = sphi 0, %s121
      %s138 = sphi 0, %s122
    $region4: #{tpu_custom_call.1} parent=1 // loop_header_branch
      %17 = sbr.rel (%p15) target = $region8
    $region5: #{tpu_custom_call.1} parent=1 // loop_body
      %s19 = ssub.s32 %s14, 1
      %s20 = ssub.s32 %s14, 2
      %s21 = sadd.s32 %s14, 1
      %s22 = ssub.s32 %s14, %s21
      %p23 = scmp.eq.s32.totalorder %s22, 0
      %s25 = sadd.s32 %s24, 1
      %s26 = scalar_select %p23, %s24, %s25
      %p29 = pneg %p23
      %p30 = scmp.eq.s32.totalorder %s14, 1
      %p31 = por %p29, %p30
      %p32 = scmp.ne.s32.totalorder %s24, %s27
      %p33 = scmp.eq.s32.totalorder %s14, 0
      %p34 = por %p32, %p33
      %p35 = scmp.ne.s32.totalorder %s24, %s27
      %p36 = scmp.eq.s32.totalorder %s19, 1
      %p37 = por %p35, %p36
      %p38 = scmp.ne.s32.totalorder %s27, %s28
      %p39 = scmp.eq.s32.totalorder %s19, 0
      %p40 = por %p38, %p39
      %p41 = scmp.ne.s32.totalorder %s27, %s28
      %p42 = scmp.eq.s32.totalorder %s20, 1
      %p43 = por %p41, %p42
      %p45 = scmp.ne.s32.totalorder %s28, %s44
      %p46 = scmp.eq.s32.totalorder %s20, 0
      %p47 = por %p45, %p46
      %s48 = ssub.s32 %s14, %s21
      %p49 = scmp.eq.s32.totalorder %s48, 0
      %s51 = sadd.s32 %s50, 1
      %s52 = scalar_select %p49, %s50, %s51
      %p55 = pneg %p49
      %p56 = scmp.eq.s32.totalorder %s14, 1
      %p57 = por %p55, %p56
      %p58 = scmp.ne.s32.totalorder %s50, %s53
      %p59 = scmp.eq.s32.totalorder %s14, 0
      %p60 = por %p58, %p59
      %p61 = scmp.ne.s32.totalorder %s50, %s53
      %p62 = scmp.eq.s32.totalorder %s19, 1
      %p63 = por %p61, %p62
      %p64 = scmp.ne.s32.totalorder %s53, %s54
      %p65 = scmp.eq.s32.totalorder %s19, 0
      %p66 = por %p64, %p65
      %p67 = scmp.ne.s32.totalorder %s53, %s54
      %p68 = scmp.eq.s32.totalorder %s20, 1
      %p69 = por %p67, %p68
      %p71 = scmp.ne.s32.totalorder %s54, %s70
      %p72 = scmp.eq.s32.totalorder %s20, 0
      %p73 = por %p71, %p72
      %s75 = sadd.s32 %s74, 1
      %p78 = scmp.eq.s32.totalorder %s14, 1
      %p79 = scmp.ne.s32.totalorder %s74, %s76
      %p80 = scmp.eq.s32.totalorder %s14, 0
      %p81 = por %p79, %p80
      %p82 = scmp.ne.s32.totalorder %s74, %s76
      %p83 = scmp.eq.s32.totalorder %s19, 1
      %p84 = por %p82, %p83
      %p85 = scmp.ne.s32.totalorder %s76, %s77
      %p86 = scmp.eq.s32.totalorder %s19, 0
      %p87 = por %p85, %p86
      %p88 = scmp.ne.s32.totalorder %s76, %s77
      %p89 = scmp.eq.s32.totalorder %s20, 1
      %p90 = por %p88, %p89
      %p92 = scmp.ne.s32.totalorder %s77, %s91
      %p93 = scmp.eq.s32.totalorder %s20, 0
      %p94 = por %p92, %p93
      %s96 = sadd.s32 %s95, 1
      %p99 = scmp.eq.s32.totalorder %s14, 1
      %p100 = scmp.ne.s32.totalorder %s95, %s97
      %p101 = scmp.eq.s32.totalorder %s14, 0
      %p102 = por %p100, %p101
      %p103 = scmp.ne.s32.totalorder %s95, %s97
      %p104 = scmp.eq.s32.totalorder %s19, 1
      %p105 = por %p103, %p104
      %p106 = scmp.ne.s32.totalorder %s97, %s98
      %p107 = scmp.eq.s32.totalorder %s19, 0
      %p108 = por %p106, %p107
      %p109 = scmp.ne.s32.totalorder %s97, %s98
      %p110 = scmp.eq.s32.totalorder %s20, 1
      %p111 = por %p109, %p110
      %p113 = scmp.ne.s32.totalorder %s98, %s112
      %p114 = scmp.eq.s32.totalorder %s20, 0
      %p115 = por %p113, %p114
      %s116 = ssub.s32 %s14, %s21
      %p117 = scmp.eq.s32.totalorder %s116, 0
      %s119 = sadd.s32 %s118, 1
      %s120 = scalar_select %p117, %s118, %s119
      %p123 = pneg %p117
      %p124 = scmp.eq.s32.totalorder %s14, 1
      %p125 = por %p123, %p124
      %p126 = scmp.ne.s32.totalorder %s118, %s121
      %p127 = scmp.eq.s32.totalorder %s14, 0
      %p128 = por %p126, %p127
      %p129 = scmp.ne.s32.totalorder %s118, %s121
      %p130 = scmp.eq.s32.totalorder %s19, 1
      %p131 = por %p129, %p130
      %p132 = scmp.ne.s32.totalorder %s121, %s122
      %p133 = scmp.eq.s32.totalorder %s19, 0
      %p134 = por %p132, %p133
      %p135 = scmp.ne.s32.totalorder %s121, %s122
      %p136 = scmp.eq.s32.totalorder %s20, 1
      %p137 = por %p135, %p136
      %p139 = scmp.ne.s32.totalorder %s122, %s138
      %p140 = scmp.eq.s32.totalorder %s20, 0
      %p141 = por %p139, %p140
      %p142 = scmp.le.s32.totalorder 1, %s14
      %p143 = scmp.lt.s32.totalorder %s14, 3
      %p144 = pnand %p142, %p143
      %p145 = pneg %p144
      // Predicated region
      $region9: #{tpu_custom_call.1} parent=5 // pred_check
        _
      $region10: #{tpu_custom_call.1} parent=5 // pred_check_branch
        %147 = sbr.rel (%p144) target = $region12
      $region11: #{tpu_custom_call.1} parent=5 // pred_region
        %s148 = ssub.s32 %s14, 1
        // Predicated region
        $region13: #{tpu_custom_call.1} parent=11 // pred_check
          %p149 = pneg %p87
        $region14: #{tpu_custom_call.1} parent=11 // pred_check_branch
          %151 = sbr.rel (%p149) target = $region16
        $region15: #{tpu_custom_call.1} parent=11 // pred_region
          _
        $region16: #{tpu_custom_call.1} parent=11 // pred_fallthru
          _
        // Predicated region
        $region17: #{tpu_custom_call.1} parent=11 // pred_check
          %p152 = pneg %p108
        $region18: #{tpu_custom_call.1} parent=11 // pred_check_branch
          %154 = sbr.rel (%p152) target = $region20
        $region19: #{tpu_custom_call.1} parent=11 // pred_region
          %s156 = ssub.s32 2048, 2048
          %157 = vsyncadd [#allocation3], %s156
          %s158 = sshll.u32 [#allocation2], 4
          %s159 = int_to_ptr.vmem [resolvable:$true] %s158
          %164 = dma.hbm_to_vmem [thread:$0]  %s3, 2048, %s159, [#allocation3], 128, 128, 8
        $region20: #{tpu_custom_call.1} parent=11 // pred_fallthru
          _
      $region12: #{tpu_custom_call.1} parent=5 // pred_fallthru
        _
      %p165 = scmp.lt.s32.totalorder %s14, 2
      // Predicated region
      $region21: #{tpu_custom_call.1} parent=5 // pred_check
        %p166 = pneg %p165
      $region22: #{tpu_custom_call.1} parent=5 // pred_check_branch
        %168 = sbr.rel (%p166) target = $region24
      $region23: #{tpu_custom_call.1} parent=5 // pred_region
        // Predicated region
        $region25: #{tpu_custom_call.1} parent=23 // pred_check
          %p169 = pneg %p34
        $region26: #{tpu_custom_call.1} parent=23 // pred_check_branch
          %171 = sbr.rel (%p169) target = $region28
        $region27: #{tpu_custom_call.1} parent=23 // pred_region
          %p172 = scmp.lt.s32.totalorder %s14, 1
          %s173 = scalar_select %p172, %s14, 1
          %s174 = smul.addr %s173, 2
          %s175 = smul.addr %s174, 8
          %s176 = scalar_lea.vmem %s0, %s175
        $region28: #{tpu_custom_call.1} parent=23 // pred_fallthru
          _
        // Predicated region
        $region29: #{tpu_custom_call.1} parent=23 // pred_check
          %p177 = pneg %p60
        $region30: #{tpu_custom_call.1} parent=23 // pred_check_branch
          %179 = sbr.rel (%p177) target = $region32
        $region31: #{tpu_custom_call.1} parent=23 // pred_region
          %p180 = scmp.lt.s32.totalorder %s14, 1
          %s181 = scalar_select %p180, %s14, 1
          %s182 = smul.addr %s181, 2
          %s183 = smul.addr %s182, 8
          %s184 = scalar_lea.vmem %s1, %s183
        $region32: #{tpu_custom_call.1} parent=23 // pred_fallthru
          _
      $region24: #{tpu_custom_call.1} parent=5 // pred_fallthru
        _
      %p185 = scmp.le.s32.totalorder 1, %s14
      %p186 = scmp.lt.s32.totalorder %s14, 3
      %p187 = pnand %p185, %p186
      %p188 = pneg %p187
      // Predicated region
      $region33: #{tpu_custom_call.1} parent=5 // pred_check
        _
      $region34: #{tpu_custom_call.1} parent=5 // pred_check_branch
        %190 = sbr.rel (%p187) target = $region36
      $region35: #{tpu_custom_call.1} parent=5 // pred_region
        %s191 = ssub.s32 %s14, 1
        // Predicated region
        $region37: #{tpu_custom_call.1} parent=35 // pred_check
          %p192 = pneg %p108
        $region38: #{tpu_custom_call.1} parent=35 // pred_check_branch
          %194 = sbr.rel (%p192) target = $region40
        $region39: #{tpu_custom_call.1} parent=35 // pred_region
          %195 = dma.done [#allocation3], 2048
        $region40: #{tpu_custom_call.1} parent=35 // pred_fallthru
          _
        %p196 = scmp.lt.s32.totalorder %s19, 1
        %s197 = scalar_select %p196, %s19, 1
        %s198 = smul.addr %s197, 2
        %s199 = smul.addr %s198, 8
        %s200 = scalar_lea.vmem %s0, %s199
        %p201 = pneg %p40
        %p202 = pneg %p37
        %p203 = scmp.lt.s32.totalorder %s19, 1
        %s204 = scalar_select %p203, %s19, 1
        %s205 = smul.addr %s204, 2
        %s206 = smul.addr %s205, 8
        %s207 = scalar_lea.vmem %s1, %s206
        %p208 = pneg %p66
        %p209 = pneg %p63
        %p210 = pneg %p87
        %p211 = pneg %p84
        %p212 = pneg %p108
        %p213 = pneg %p105
        %p214 = pneg %p134
        %p215 = pneg %p131
        %s216 = sand.u32 %s121, 1
        %s217 = scalar_lea.sflag [#allocation4], %s216
        %s218 = sand.u32 %s121, 1
        %s219 = smul.addr %s218, 16
        %s220 = scalar_lea.vmem [#allocation5], %s219
        %p221 = scmp.lt.s32.totalorder %s19, 1
        %s222 = scalar_select %p221, %s19, 1
        %s223 = smul.addr %s222, 2
        %s224 = smul.addr %s223, 8
        %s225 = scalar_lea.vmem %s0, %s224
        %p226 = scmp.lt.s32.totalorder %s19, 1
        %s227 = scalar_select %p226, %s19, 1
        %s228 = smul.addr %s227, 2
        %s229 = smul.addr %s228, 8
        %s230 = scalar_lea.vmem %s1, %s229
        %v231 = vld [vmem:[%s225] sm:$0xff]
        %v232 = vld [vmem:[%s225 + $0x8] sm:$0xff]
        %v234 = vrot.slane %v232, 7
        %vm237 = vcmask 1040384
        %v238 = vrot.slane %v231, 7
        %v239 = vsel %vm237, %v238, %v234
        %v242 = vsel %vm237, %v234, %v238
        %vm243 = vcmask 1046528
        %v244 = vrot.slane %v231, 1
        %v245 = vrot.slane %v232, 1
        %v246 = vsel %vm243, %v244, %v245
        %v249 = vsel %vm243, %v245, %v244
        %250 = vrot.lane.b32.xlu0 %v231, 4
        %v251 = vpop.permute.xlu0 %250
        %252 = vrot.lane.b32.xlu0 %v232, 4
        %v253 = vpop.permute.xlu0 %252
        %257 = vrot.lane.b32.xlu0 %v246, 8
        %v258 = vpop.permute.xlu0 %257
        %259 = vrot.lane.b32.xlu0 %v249, 8
        %v260 = vpop.permute.xlu0 %259
        %vm263 = vcmask 31744
        %v264 = vsel %vm263, %v242, %v251
        %v265 = vsel %vm263, %v239, %v253
        %vm266 = vcmask 64512
        %v267 = vsel %vm266, %v264, %v258
        %v268 = vsel %vm266, %v265, %v260
        %v269 = vld [vmem:[%s2] sm:$0xff]
        %v270 = vld [vmem:[%s2 + $0x8] sm:$0xf]
        %v271 = vld [vmem:[%s230] sm:$0xff]
        %v272 = vld [vmem:[%s230 + $0x8] sm:$0xff]
        %v273 = vlaneseq
        %v274 = vand.u32 %v273, 127
        %275 = vset.pattern.permute.xlu0 0
        %276 = vperm.xlu0 %275, %v271
        %v277 = vpop.permute.xlu0 %276
        %278 = vset.pattern.permute.xlu0 0
        %279 = vperm.xlu0 %278, %v272
        %v280 = vpop.permute.xlu0 %279
        %vm281 = vcmp.eq.s32.totalorder %v274, %v277
        %vm282 = vcmp.eq.s32.totalorder %v274, %v280
        %v283 = vadd.s32 %v271, 13
        %v284 = vadd.s32 %v272, 13
        %285 = vset.pattern.permute.xlu0 1
        %286 = vperm.xlu0 %285, %v283
        %v287 = vpop.permute.xlu0 %286
        %288 = vset.pattern.permute.xlu0 1
        %289 = vperm.xlu0 %288, %v284
        %v290 = vpop.permute.xlu0 %289
        %vm291 = vcmp.eq.s32.totalorder %v274, %v287
        %vm292 = vcmp.eq.s32.totalorder %v274, %v290
        %vm293 = vmor %vm281, %vm291
        %vm294 = vmor %vm282, %vm292
        %v295 = vadd.s32 %v271, 45
        %v296 = vadd.s32 %v272, 45
        %297 = vset.pattern.permute.xlu0 2
        %298 = vperm.xlu0 %297, %v295
        %v299 = vpop.permute.xlu0 %298
        %300 = vset.pattern.permute.xlu0 2
        %301 = vperm.xlu0 %300, %v296
        %v302 = vpop.permute.xlu0 %301
        %vm303 = vcmp.eq.s32.totalorder %v274, %v299
        %vm304 = vcmp.eq.s32.totalorder %v274, %v302
        %vm305 = vmor %vm293, %vm303
        %vm306 = vmor %vm294, %vm304
        %v307 = vadd.s32 %v271, 52
        %v308 = vadd.s32 %v272, 52
        %309 = vset.pattern.permute.xlu0 3
        %310 = vperm.xlu0 %309, %v307
        %v311 = vpop.permute.xlu0 %310
        %312 = vset.pattern.permute.xlu0 3
        %313 = vperm.xlu0 %312, %v308
        %v314 = vpop.permute.xlu0 %313
        %vm315 = vcmp.eq.s32.totalorder %v274, %v311
        %vm316 = vcmp.eq.s32.totalorder %v274, %v314
        %vm317 = vmor %vm305, %vm315
        %vm318 = vmor %vm306, %vm316
        %v319 = vsel %vm317, 1, 0
        %v320 = vsel %vm318, 1, 0
        %v321 = vcvt.s32.f32 %v319
        %v322 = vcvt.s32.f32 %v320
        %v323 = vld [vmem:[#allocation2] sm:$0xff]
        %v324 = vld [vmem:[#allocation2 + $0x8] sm:$0xff]
        %v325 = vld [vmem:[#allocation2 + $0x10] sm:$0xff]
        %v326 = vld [vmem:[#allocation2 + $0x18] sm:$0xff]
        %v327 = vld [vmem:[#allocation2 + $0x20] sm:$0xff]
        %v328 = vld [vmem:[#allocation2 + $0x28] sm:$0xff]
        %v329 = vld [vmem:[#allocation2 + $0x30] sm:$0xff]
        %v330 = vld [vmem:[#allocation2 + $0x38] sm:$0xff]
        %v331 = vld [vmem:[#allocation2 + $0x40] sm:$0xff]
        %v332 = vld [vmem:[#allocation2 + $0x48] sm:$0xff]
        %v333 = vld [vmem:[#allocation2 + $0x50] sm:$0xff]
        %v334 = vld [vmem:[#allocation2 + $0x58] sm:$0xff]
        %v335 = vld [vmem:[#allocation2 + $0x60] sm:$0xff]
        %v336 = vld [vmem:[#allocation2 + $0x68] sm:$0xff]
        %v337 = vld [vmem:[#allocation2 + $0x70] sm:$0xff]
        %v338 = vld [vmem:[#allocation2 + $0x78] sm:$0xff]
        %339 = vmatprep.subr.mxu0 0.0
        %340 = vmatpush1.msra.mxu0 %v323
        %341 = vmatprep.subr.mxu0 0.0
        %342 = vmatpush1.msra.mxu0 %v324
        %343 = vmatprep.subr.mxu0 0.0
        %344 = vmatpush1.msra.mxu0 %v325
        %345 = vmatprep.subr.mxu0 0.0
        %346 = vmatpush1.msra.mxu0 %v326
        %347 = vmatprep.subr.mxu0 0.0
        %348 = vmatpush1.msra.mxu0 %v327
        %349 = vmatprep.subr.mxu0 0.0
        %350 = vmatpush1.msra.mxu0 %v328
        %351 = vmatprep.subr.mxu0 0.0
        %352 = vmatpush1.msra.mxu0 %v329
        %353 = vmatprep.subr.mxu0 0.0
        %354 = vmatpush1.msra.mxu0 %v330
        %355 = vmatprep.subr.mxu0 0.0
        %356 = vmatpush1.msra.mxu0 %v331
        %357 = vmatprep.subr.mxu0 0.0
        %358 = vmatpush1.msra.mxu0 %v332
        %359 = vmatprep.subr.mxu0 0.0
        %360 = vmatpush1.msra.mxu0 %v333
        %361 = vmatprep.subr.mxu0 0.0
        %362 = vmatpush1.msra.mxu0 %v334
        %363 = vmatprep.subr.mxu0 0.0
        %364 = vmatpush1.msra.mxu0 %v335
        %365 = vmatprep.subr.mxu0 0.0
        %366 = vmatpush1.msra.mxu0 %v336
        %367 = vmatprep.subr.mxu0 0.0
        %368 = vmatpush1.msra.mxu0 %v337
        %369 = vmatprep.subr.mxu0 0.0
        %370 = vmatpush1.msra.mxu0 %v338
        %371 = vmatprep.subr.mxu0 0.0
        %372 = vmatpush1.msra.mxu0 0.0
        %373 = vmatprep.subr.mxu0 0.0
        %374 = vmatpush1.msra.mxu0 0.0
        %375 = vmatprep.subr.mxu0 0.0
        %376 = vmatpush1.msra.mxu0 0.0
        %377 = vmatprep.subr.mxu0 0.0
        %378 = vmatpush1.msra.mxu0 0.0
        %379 = vmatprep.subr.mxu0 0.0
        %380 = vmatpush1.msra.mxu0 0.0
        %381 = vmatprep.subr.mxu0 0.0
        %382 = vmatpush1.msra.mxu0 0.0
        %383 = vmatprep.subr.mxu0 0.0
        %384 = vmatpush1.msra.mxu0 0.0
        %385 = vmatprep.subr.mxu0 0.0
        %386 = vmatpush1.msra.mxu0 0.0
        %387 = vmatprep.subr.mxu0 0.0
        %388 = vmatpush1.msra.mxu0 0.0
        %389 = vmatprep.subr.mxu0 0.0
        %390 = vmatpush1.msra.mxu0 0.0
        %391 = vmatprep.subr.mxu0 0.0
        %392 = vmatpush1.msra.mxu0 0.0
        %393 = vmatprep.subr.mxu0 0.0
        %394 = vmatpush1.msra.mxu0 0.0
        %395 = vmatprep.subr.mxu0 0.0
        %396 = vmatpush1.msra.mxu0 0.0
        %397 = vmatprep.subr.mxu0 0.0
        %398 = vmatpush1.msra.mxu0 0.0
        %399 = vmatprep.subr.mxu0 0.0
        %400 = vmatpush1.msra.mxu0 0.0
        %401 = vmatprep.subr.mxu0 0.0
        %402 = vmatpush1.msra.mxu0 0.0
        %403 = vmatprep.mubr.f32.mxu0 0.0
        %404 = vmatmul.mubr.f32.gmra.mrb[0].mxu0 %v321
        %v405 = vpop.f32.mrb[0].mxu0
        %v406 = vadd.f32 0.0, %v405
        %v407 = vpop.f32.mrb[0].mxu0
        %408 = vmatprep.mubr.f32.mxu0 0.0
        %409 = vmatmul.mubr.f32.gmra.mrb[0].mxu0 %v322
        %v410 = vpop.f32.mrb[0].mxu0
        %v411 = vadd.f32 0.0, %v410
        %v412 = vpop.f32.mrb[0].mxu0
        %413 = vdwg.mxu0
        %vm414 = vcmask 97280
        %v416 = vsel %vm414, %v267, 0
        %v419 = vsel %vm414, %v268, 0
        %vm421 = vcmask 1043456
        %v423 = vsel %vm421, %v270, 0
        %425 = vmatprep.subr.mxu0 0.0
        %426 = vmatpush1.msra.mxu0 %v269
        %427 = vmatprep.subr.mxu0 0.0
        %428 = vmatpush1.msra.mxu0 %v423
        %429 = vmatprep.subr.mxu0 0.0
        %430 = vmatpush1.msra.mxu0 0.0
        %431 = vmatprep.subr.mxu0 0.0
        %432 = vmatpush1.msra.mxu0 0.0
        %433 = vmatprep.subr.mxu0 0.0
        %434 = vmatpush1.msra.mxu0 0.0
        %435 = vmatprep.subr.mxu0 0.0
        %436 = vmatpush1.msra.mxu0 0.0
        %437 = vmatprep.subr.mxu0 0.0
        %438 = vmatpush1.msra.mxu0 0.0
        %439 = vmatprep.subr.mxu0 0.0
        %440 = vmatpush1.msra.mxu0 0.0
        %441 = vmatprep.subr.mxu0 0.0
        %442 = vmatpush1.msra.mxu0 0.0
        %443 = vmatprep.subr.mxu0 0.0
        %444 = vmatpush1.msra.mxu0 0.0
        %445 = vmatprep.subr.mxu0 0.0
        %446 = vmatpush1.msra.mxu0 0.0
        %447 = vmatprep.subr.mxu0 0.0
        %448 = vmatpush1.msra.mxu0 0.0
        %449 = vmatprep.subr.mxu0 0.0
        %450 = vmatpush1.msra.mxu0 0.0
        %451 = vmatprep.subr.mxu0 0.0
        %452 = vmatpush1.msra.mxu0 0.0
        %453 = vmatprep.subr.mxu0 0.0
        %454 = vmatpush1.msra.mxu0 0.0
        %455 = vmatprep.subr.mxu0 0.0
        %456 = vmatpush1.msra.mxu0 0.0
        %457 = vmatprep.subr.mxu0 0.0
        %458 = vmatpush1.msra.mxu0 0.0
        %459 = vmatprep.subr.mxu0 0.0
        %460 = vmatpush1.msra.mxu0 0.0
        %461 = vmatprep.subr.mxu0 0.0
        %462 = vmatpush1.msra.mxu0 0.0
        %463 = vmatprep.subr.mxu0 0.0
        %464 = vmatpush1.msra.mxu0 0.0
        %465 = vmatprep.subr.mxu0 0.0
        %466 = vmatpush1.msra.mxu0 0.0
        %467 = vmatprep.subr.mxu0 0.0
        %468 = vmatpush1.msra.mxu0 0.0
        %469 = vmatprep.subr.mxu0 0.0
        %470 = vmatpush1.msra.mxu0 0.0
        %471 = vmatprep.subr.mxu0 0.0
        %472 = vmatpush1.msra.mxu0 0.0
        %473 = vmatprep.subr.mxu0 0.0
        %474 = vmatpush1.msra.mxu0 0.0
        %475 = vmatprep.subr.mxu0 0.0
        %476 = vmatpush1.msra.mxu0 0.0
        %477 = vmatprep.subr.mxu0 0.0
        %478 = vmatpush1.msra.mxu0 0.0
        %479 = vmatprep.subr.mxu0 0.0
        %480 = vmatpush1.msra.mxu0 0.0
        %481 = vmatprep.subr.mxu0 0.0
        %482 = vmatpush1.msra.mxu0 0.0
        %483 = vmatprep.subr.mxu0 0.0
        %484 = vmatpush1.msra.mxu0 0.0
        %485 = vmatprep.subr.mxu0 0.0
        %486 = vmatpush1.msra.mxu0 0.0
        %487 = vmatprep.subr.mxu0 0.0
        %488 = vmatpush1.msra.mxu0 0.0
        %489 = vmatprep.mubr.f32.mxu0 0.0
        %490 = vmatmul.mubr.f32.gmra.mrb[0].mxu0 %v416
        %v491 = vpop.f32.mrb[0].mxu0
        %v492 = vadd.f32 %v406, %v491
        %v493 = vpop.f32.mrb[0].mxu0
        %494 = vmatprep.mubr.f32.mxu0 0.0
        %495 = vmatmul.mubr.f32.gmra.mrb[0].mxu0 %v419
        %v496 = vpop.f32.mrb[0].mxu0
        %v497 = vadd.f32 %v411, %v496
        %v498 = vpop.f32.mrb[0].mxu0
        %499 = vdwg.mxu0
        %500 = vst [vmem:[%s220] sm:$0xff] %v492
        %501 = vst [vmem:[%s220 + $0x8] sm:$0xff] %v497
        %s502 = sand.u32 %s121, 1
        %s503 = scalar_lea.sflag [#allocation4], %s502
        %s504 = sand.u32 %s121, 1
        %s505 = smul.addr %s504, 16
        %s506 = scalar_lea.vmem [#allocation5], %s505
        // Predicated region
        $region41: #{tpu_custom_call.1} parent=35 // pred_check
          %p507 = pneg %p131
        $region42: #{tpu_custom_call.1} parent=35 // pred_check_branch
          %509 = sbr.rel (%p507) target = $region44
        $region43: #{tpu_custom_call.1} parent=35 // pred_region
          %s511 = ssub.s32 256, 256
          %512 = vsyncadd %s503, %s511
          %s513 = smul.addr %s19, 2
          %s514 = smul.addr %s513, 128
          %s515 = scalar_lea.hbm %s4, %s514
          %s516 = sshll.u32 %s506, 4
          %s517 = int_to_ptr.vmem [resolvable:$true] %s516
          %522 = dma.vmem_to_hbm [thread:$0]  %s517, 256, %s515, %s503, 128, 128, 8
        $region44: #{tpu_custom_call.1} parent=35 // pred_fallthru
          _
      $region36: #{tpu_custom_call.1} parent=5 // pred_fallthru
        _
      %p523 = scmp.le.s32.totalorder 2, %s14
      // Predicated region
      $region45: #{tpu_custom_call.1} parent=5 // pred_check
        %p524 = pneg %p523
      $region46: #{tpu_custom_call.1} parent=5 // pred_check_branch
        %526 = sbr.rel (%p524) target = $region48
      $region47: #{tpu_custom_call.1} parent=5 // pred_region
        %s527 = ssub.s32 %s14, 2
        // Predicated region
        $region49: #{tpu_custom_call.1} parent=47 // pred_check
          %p528 = pneg %p137
        $region50: #{tpu_custom_call.1} parent=47 // pred_check_branch
          %530 = sbr.rel (%p528) target = $region52
        $region51: #{tpu_custom_call.1} parent=47 // pred_region
          %s531 = sand.u32 %s122, 1
          %s532 = scalar_lea.sflag [#allocation4], %s531
          %s533 = sand.u32 %s122, 1
          %s534 = smul.addr %s533, 16
          %s535 = scalar_lea.vmem [#allocation5], %s534
          %536 = dma.done %s532, 256
        $region52: #{tpu_custom_call.1} parent=47 // pred_fallthru
          _
      $region48: #{tpu_custom_call.1} parent=5 // pred_fallthru
        _
    $region6: #{tpu_custom_call.1} parent=1 // loop_footer
      %s18 = sadd.s32 1, %s14
    $region7: #{tpu_custom_call.1} parent=1 // loop_footer_branch
      %13 = sbr.rel target = $region3
    $region8: #{tpu_custom_call.1} parent=1 // loop_exit
      _
    %537 = vsyncpa [#allocation3], 1
    %s538 = scalar_lea.sflag [#allocation3], 1
    %539 = vsyncpa %s538, 1
    %540 = vsyncpa [#allocation4], 1
    %s541 = scalar_lea.sflag [#allocation4], 1
    %542 = vsyncpa %s541, 1

</llo_original>
